<compile_context>
chip_gen: v7x
topology: tpu7x:2x2x1
jax: 0.10.0
libtpu: 0.0.40
codegen_flags: <defaults>
</compile_context>

<pallas_src>
import jax
import jax.numpy as jnp
from jax.experimental import pallas as pl
from jax.experimental.pallas import tpu as pltpu


def _ffn_kernel(x_ref, w1_ref, b1_ref, w2_ref, b2_ref, o_ref, acc_ref):
    # Grid: (i over M row tiles, j over output-E tiles, k over hidden H tiles).
    # x_ref:  (tm, Ep)   w1_ref: (Ep, th)  b1_ref: (1, th)
    # w2_ref: (th, tn)   b2_ref: (1, tn)   o_ref:  (tm, tn)
    # acc_ref: (tm, tn) f32 scratch, resident across the k (reduction) axis.
    k = pl.program_id(2)

    @pl.when(k == 0)
    def _():
        acc_ref[...] = jnp.zeros_like(acc_ref)

    # Linear 1 for this hidden chunk (native-dtype MXU operands, f32 accum).
    h = jnp.dot(x_ref[...], w1_ref[...], preferred_element_type=jnp.float32)
    h = h + b1_ref[...].astype(jnp.float32)

    # Exact GELU (erf-based, matches torch.nn.GELU() default).
    inv_sqrt2 = jnp.float32(0.7071067811865476)
    g = 0.5 * h * (1.0 + jax.lax.erf(h * inv_sqrt2))

    # Partial Linear 2 contribution of this hidden chunk.
    acc_ref[...] += jnp.dot(g.astype(w2_ref.dtype), w2_ref[...],
                            preferred_element_type=jnp.float32)

    @pl.when(k == pl.num_programs(2) - 1)
    def _():
        o_ref[...] = (acc_ref[...] + b2_ref[...].astype(jnp.float32)).astype(o_ref.dtype)


def _ceil_to(a, b):
    return -(-a // b) * b


def _cdiv(a, b):
    return -(-a // b)


def _pad2d(a, rows, cols):
    if a.shape == (rows, cols):
        return a
    return jnp.zeros((rows, cols), a.dtype).at[: a.shape[0], : a.shape[1]].set(a)


def _tpu_vmem_info():
    """Return (vmem_capacity_bytes, likely_two_tensorcores)."""
    try:
        cap = int(pltpu.get_tpu_info().vmem_capacity_bytes)
    except Exception:
        cap = 64 * 1024 * 1024  # conservative fallback (valid on every chip)
    # v7x-like: 64 MiB VMEM per TC and 2 TCs per chip.
    return cap, cap <= 64 * 1024 * 1024


def _vmem_need(tm, tn, th, ep, x_isz, w_isz, o_isz):
    """Approximate per-step VMEM footprint (double-buffered pipeline)."""
    return (2 * tm * ep * x_isz            # x tiles
            + 2 * ep * th * w_isz          # W1 tiles
            + 2 * th * tn * w_isz          # W2 tiles
            + 2 * 8 * th * w_isz           # b1 tiles (sublane-padded)
            + 2 * 8 * tn * w_isz           # b2 tiles (sublane-padded)
            + 2 * tm * tn * o_isz          # out tiles
            + tm * tn * 4                  # f32 accumulator
            + 2 * tm * th * 4)             # GELU intermediate headroom


def _choose_tiles(m, ep, hp, x_isz, w_isz, o_isz, budget, two_cores):
    """Pick (tm, tn, th) maximizing per-step MXU work under the VMEM budget."""
    m8 = _ceil_to(max(m, 1), 8)
    cap = m8
    if two_cores and m > 8:
        # Ensure >= 2 row tiles on 2-TC chips so both cores are used.
        cap = min(cap, _ceil_to(_cdiv(m, 2), 8))
    tm_cands = sorted({c for c in (1024, 768, 512, 384, 256, 128, 64, 32, 16, 8)
                       if c <= cap} | {cap}, reverse=True)

    th_cands = {c for c in (1024, 512, 256, 128) if c <= hp and hp % c == 0}
    if hp <= 2048:
        th_cands.add(hp)
    th_cands = sorted(th_cands, reverse=True)

    tn_cands = [ep] + [c for c in (4096, 2048, 1024, 512, 256, 128)
                       if c < ep and ep % c == 0]

    for tn in tn_cands:  # strongly prefer output-E untiled (no GELU recompute)
        best = None
        for tm in tm_cands:
            for th in th_cands:
                if _vmem_need(tm, tn, th, ep, x_isz, w_isz, o_isz) <= budget:
                    key = (tm * th, tm, th)
                    if best is None or key > best[0]:
                        best = (key, tm, tn, th)
        if best is not None:
            return best[1], best[2], best[3]
    # Last resort for extreme shapes: smallest tiles.
    return tm_cands[-1], 128, th_cands[-1]


def feed_forward(x, w1, b1, w2, b2):
    """x: (..., E). w1: (E, H), b1: (H,)/(1,H), w2: (H, E), b2: (E,)/(1,E).

    Weights are (in_features, out_features), i.e. W = torch_weight.T, so the
    kernel computes x @ W + b directly.  Returns the same shape as x.
    """
    E = x.shape[-1]
    H = w1.shape[1]
    orig_shape = x.shape
    x2d = x.reshape(-1, E)
    M = x2d.shape[0]

    b1 = b1.reshape(1, -1)
    b2 = b2.reshape(1, -1)

    x_isz = x.dtype.itemsize
    w_isz = w1.dtype.itemsize
    o_isz = x.dtype.itemsize

    # Lane-dense padded sizes (multiples of 128 on the minor axes).
    Ep = _ceil_to(E, 128)
    Hp0 = _ceil_to(H, 128)

    vmem_cap, two_cores = _tpu_vmem_info()
    # ~75% of physical VMEM, capped at 100 MiB (v5e/v6e: ~96 MiB; v7x: ~48 MiB).
    budget = min((vmem_cap * 3) // 4, 100 * 1024 * 1024)

    tm, tn, th = _choose_tiles(M, Ep, Hp0, x_isz, w_isz, o_isz, budget, two_cores)

    Mp = _ceil_to(M, tm)
    Hp = _ceil_to(Hp0, th)
    Np = _ceil_to(Ep, tn)

    # Padding is a no-op when already aligned; for repeated calls with
    # unaligned E/H, pre-pad the weights once outside this function.
    xp = _pad2d(x2d, Mp, Ep)
    w1p = _pad2d(w1, Ep, Hp)
    b1p = _pad2d(b1, 1, Hp)
    w2p = _pad2d(w2, Hp, Np)
    b2p = _pad2d(b2, 1, Np)

    n_m, n_n, n_k = Mp // tm, Np // tn, Hp // th
    grid = (n_m, n_n, n_k)

    need = _vmem_need(tm, tn, th, Ep, x_isz, w_isz, o_isz)
    vmem_limit = int(min(max(need + need // 4, 16 * 1024 * 1024),
                         max((vmem_cap * 7) // 8, 48 * 1024 * 1024)))

    # Honest HBM traffic: weights are re-streamed per row tile (and W1/b1
    # additionally per output-E tile); x is read once per row tile.
    cost = pl.CostEstimate(
        flops=2 * Mp * Hp * (n_n * Ep + Np),
        transcendentals=n_n * Mp * Hp,
        bytes_accessed=(Mp * Ep * x_isz
                        + n_m * n_n * int(w1p.size + b1p.size) * w_isz
                        + n_m * int(w2p.size + b2p.size) * w_isz
                        + Mp * Np * o_isz),
    )

    out = pl.pallas_call(
        _ffn_kernel,
        out_shape=jax.ShapeDtypeStruct((Mp, Np), x.dtype),
        grid_spec=pltpu.PrefetchScalarGridSpec(
            num_scalar_prefetch=0,
            grid=grid,
            in_specs=[
                pl.BlockSpec((tm, Ep), lambda i, j, k: (i, 0)),   # x row tile
                pl.BlockSpec((Ep, th), lambda i, j, k: (0, k)),   # W1 hidden chunk
                pl.BlockSpec((1, th), lambda i, j, k: (0, k)),    # b1 chunk
                pl.BlockSpec((th, tn), lambda i, j, k: (k, j)),   # W2 chunk
                pl.BlockSpec((1, tn), lambda i, j, k: (0, j)),    # b2 chunk
            ],
            out_specs=pl.BlockSpec((tm, tn), lambda i, j, k: (i, j)),
            scratch_shapes=[pltpu.VMEM((tm, tn), jnp.float32)],
        ),
        compiler_params=pltpu.CompilerParams(
            dimension_semantics=("parallel", "parallel", "arbitrary"),
            vmem_limit_bytes=vmem_limit,
        ),
        cost_estimate=cost,
    )(xp, w1p, b1p, w2p, b2p)

    return out[:M, :E].reshape(orig_shape)


def _reference(x, w1, b1, w2, b2):
    h = x @ w1 + b1[0]
    g = 0.5 * h * (1.0 + jax.lax.erf(h / jnp.sqrt(2.0)))
    return g @ w2 + b2[0]


if __name__ == "__main__":
    key = jax.random.PRNGKey(0)
    batch, seq, emb = 2, 8, 32
    hidden = emb * 4  # 128

    k_x, k_w1, k_b1, k_w2, k_b2 = jax.random.split(key, 5)

    # Deterministic parameter init (uniform, torch-Linear-like scale).
    lim1 = 1.0 / jnp.sqrt(emb)
    lim2 = 1.0 / jnp.sqrt(hidden)
    w1 = jax.random.uniform(k_w1, (emb, hidden), jnp.float32, -lim1, lim1)
    b1 = jax.random.uniform(k_b1, (1, hidden), jnp.float32, -lim1, lim1)
    w2 = jax.random.uniform(k_w2, (hidden, emb), jnp.float32, -lim2, lim2)
    b2 = jax.random.uniform(k_b2, (1, emb), jnp.float32, -lim2, lim2)

    x = jax.random.normal(k_x, (batch, seq, emb), jnp.float32)

    out = jax.block_until_ready(feed_forward(x, w1, b1, w2, b2))

    ref = _reference(x.reshape(-1, emb), w1, b1, w2, b2).reshape(x.shape)
    assert out.shape == x.shape
    assert jnp.allclose(out, ref, atol=1e-4, rtol=1e-4), float(
        jnp.max(jnp.abs(out - ref)))

    print("KERNEL_OK")
</pallas_src>

<mosaic_0001>
module attributes {stable_mosaic.version = 11 : i64} {
  func.func @_ffn_kernel(%arg0: i32, %arg1: i32, %arg2: i32, %arg3: memref<8x128xf32, #tpu.memory_space<vmem>>, %arg4: memref<128x128xf32, #tpu.memory_space<vmem>>, %arg5: memref<1x128xf32, #tpu.memory_space<vmem>>, %arg6: memref<128x128xf32, #tpu.memory_space<vmem>>, %arg7: memref<1x128xf32, #tpu.memory_space<vmem>>, %arg8: memref<8x128xf32, #tpu.memory_space<vmem>>, %arg9: memref<8x128xf32, #tpu.memory_space<vmem>>) attributes {dimension_semantics = [#tpu.dimension_semantics<parallel>, #tpu.dimension_semantics<parallel>, #tpu.dimension_semantics<arbitrary>], iteration_bounds = array<i64: 2, 1, 1>, scalar_prefetch = 0 : i64, scratch_operands = 1 : i64, tpu.core_type = #tpu.core_type<tc>, window_params = [{transform_indices = @transform_0, window_bounds = array<i64: 8, 128>}, {transform_indices = @transform_1, window_bounds = array<i64: 128, 128>}, {transform_indices = @transform_2, window_bounds = array<i64: 1, 128>}, {transform_indices = @transform_3, window_bounds = array<i64: 128, 128>}, {transform_indices = @transform_4, window_bounds = array<i64: 1, 128>}, {transform_indices = @transform_5, window_bounds = array<i64: 8, 128>}]} {
    %c0_i32 = arith.constant 0 : i32
    %0 = arith.cmpi eq, %arg2, %c0_i32 : i32
    %1 = arith.extui %0 : i1 to i32
    %c0_i32_0 = arith.constant 0 : i32
    %2 = arith.cmpi ne, %1, %c0_i32_0 : i32
    scf.if %2 {
      %cst_18 = arith.constant 0.000000e+00 : f32
      %25 = vector.broadcast %cst_18 : f32 to vector<8x128xf32>
      %c0_19 = arith.constant 0 : index
      %c0_20 = arith.constant 0 : index
      %26 = vector.load %arg9[%c0_19, %c0_20] : memref<8x128xf32, #tpu.memory_space<vmem>>, vector<8x128xf32>
      tpu.vector_store %arg9[%c0_19, %c0_20], %25 {strides = array<i32>} : memref<8x128xf32, #tpu.memory_space<vmem>>, vector<8x128xf32>,
    } else {
    }
    %c0 = arith.constant 0 : index
    %c0_1 = arith.constant 0 : index
    %3 = vector.load %arg3[%c0, %c0_1] : memref<8x128xf32, #tpu.memory_space<vmem>>, vector<8x128xf32>
    %c0_2 = arith.constant 0 : index
    %c0_3 = arith.constant 0 : index
    %4 = vector.load %arg4[%c0_2, %c0_3] : memref<128x128xf32, #tpu.memory_space<vmem>>, vector<128x128xf32>
    %cst = arith.constant dense<0.000000e+00> : vector<8x128xf32>
    %5 = tpu.matmul %3, %4, %cst {dimension_numbers = #tpu.dot_dimension_numbers<[1], [0], [0], [1], [0, 0, 1, 1], [], []>} : vector<8x128xf32>, vector<128x128xf32>, vector<8x128xf32> -> vector<8x128xf32>
    %c0_4 = arith.constant 0 : index
    %c0_5 = arith.constant 0 : index
    %6 = vector.load %arg5[%c0_4, %c0_5] : memref<1x128xf32, #tpu.memory_space<vmem>>, vector<1x128xf32>
    %7 = vector.broadcast %6 : vector<1x128xf32> to vector<8x128xf32>
    %8 = arith.addf %5, %7 : vector<8x128xf32>
    %cst_6 = arith.constant 5.000000e-01 : f32
    %9 = vector.broadcast %cst_6 : f32 to vector<8x128xf32>
    %10 = arith.mulf %9, %8 : vector<8x128xf32>
    %cst_7 = arith.constant 0.707106769 : f32
    %11 = vector.broadcast %cst_7 : f32 to vector<8x128xf32>
    %12 = arith.mulf %8, %11 : vector<8x128xf32>
    %13 = math.erf %12 : vector<8x128xf32>
    %cst_8 = arith.constant 1.000000e+00 : f32
    %14 = vector.broadcast %cst_8 : f32 to vector<8x128xf32>
    %15 = arith.addf %14, %13 : vector<8x128xf32>
    %16 = arith.mulf %10, %15 : vector<8x128xf32>
    %c0_9 = arith.constant 0 : index
    %c0_10 = arith.constant 0 : index
    %17 = vector.load %arg9[%c0_9, %c0_10] : memref<8x128xf32, #tpu.memory_space<vmem>>, vector<8x128xf32>
    %c0_11 = arith.constant 0 : index
    %c0_12 = arith.constant 0 : index
    %18 = vector.load %arg6[%c0_11, %c0_12] : memref<128x128xf32, #tpu.memory_space<vmem>>, vector<128x128xf32>
    %cst_13 = arith.constant dense<0.000000e+00> : vector<8x128xf32>
    %19 = tpu.matmul %16, %18, %cst_13 {dimension_numbers = #tpu.dot_dimension_numbers<[1], [0], [0], [1], [0, 0, 1, 1], [], []>} : vector<8x128xf32>, vector<128x128xf32>, vector<8x128xf32> -> vector<8x128xf32>
    %20 = arith.addf %17, %19 : vector<8x128xf32>
    %c0_14 = arith.constant 0 : index
    %c0_15 = arith.constant 0 : index
    %21 = vector.load %arg9[%c0_14, %c0_15] : memref<8x128xf32, #tpu.memory_space<vmem>>, vector<8x128xf32>
    tpu.vector_store %arg9[%c0_14, %c0_15], %20 {strides = array<i32>} : memref<8x128xf32, #tpu.memory_space<vmem>>, vector<8x128xf32>,
    %c0_i32_16 = arith.constant 0 : i32
    %22 = arith.cmpi eq, %arg2, %c0_i32_16 : i32
    %23 = arith.extui %22 : i1 to i32
    %c0_i32_17 = arith.constant 0 : i32
    %24 = arith.cmpi ne, %23, %c0_i32_17 : i32
    scf.if %24 {
      %c0_18 = arith.constant 0 : index
      %c0_19 = arith.constant 0 : index
      %25 = vector.load %arg9[%c0_18, %c0_19] : memref<8x128xf32, #tpu.memory_space<vmem>>, vector<8x128xf32>
      %c0_20 = arith.constant 0 : index
      %c0_21 = arith.constant 0 : index
      %26 = vector.load %arg7[%c0_20, %c0_21] : memref<1x128xf32, #tpu.memory_space<vmem>>, vector<1x128xf32>
      %27 = vector.broadcast %26 : vector<1x128xf32> to vector<8x128xf32>
      %28 = arith.addf %25, %27 : vector<8x128xf32>
      %c0_22 = arith.constant 0 : index
      %c0_23 = arith.constant 0 : index
      %29 = vector.load %arg8[%c0_22, %c0_23] : memref<8x128xf32, #tpu.memory_space<vmem>>, vector<8x128xf32>
      tpu.vector_store %arg8[%c0_22, %c0_23], %28 {strides = array<i32>} : memref<8x128xf32, #tpu.memory_space<vmem>>, vector<8x128xf32>,
    } else {
    }
    return
  }
  func.func @transform_0(%arg0: i32, %arg1: i32, %arg2: i32) -> (i32, i32) {
    %c0_i32 = arith.constant 0 : i32
    %c0_i32_0 = arith.constant 0 : i32
    return %arg0, %c0_i32 : i32, i32
  }
  func.func @transform_1(%arg0: i32, %arg1: i32, %arg2: i32) -> (i32, i32) {
    %c0_i32 = arith.constant 0 : i32
    %c0_i32_0 = arith.constant 0 : i32
    return %c0_i32, %arg2 : i32, i32
  }
  func.func @transform_2(%arg0: i32, %arg1: i32, %arg2: i32) -> (i32, i32) {
    %c0_i32 = arith.constant 0 : i32
    %c0_i32_0 = arith.constant 0 : i32
    return %c0_i32, %arg2 : i32, i32
  }
  func.func @transform_3(%arg0: i32, %arg1: i32, %arg2: i32) -> (i32, i32) {
    %c0_i32 = arith.constant 0 : i32
    return %arg2, %arg1 : i32, i32
  }
  func.func @transform_4(%arg0: i32, %arg1: i32, %arg2: i32) -> (i32, i32) {
    %c0_i32 = arith.constant 0 : i32
    %c0_i32_0 = arith.constant 0 : i32
    return %c0_i32, %arg1 : i32, i32
  }
  func.func @transform_5(%arg0: i32, %arg1: i32, %arg2: i32) -> (i32, i32) {
    %c0_i32 = arith.constant 0 : i32
    return %arg0, %arg1 : i32, i32
  }
}

</mosaic_0001>

<llo_original>
// kernel: tpu_custom_call.1
$region0: #{tpu_custom_call.1}
  #allocation0 [shape = 'u32[]', space=smem, size = 0x4, offset = 0x4, fixed_abs, tag = 'smem constant byte address 0x4 - core index']
  #allocation1 [shape = 'u32[144,128]{1,0:T(1,128)}', space=vmem, size = 0x12000, scoped, tag = 'internal scratch']
  #allocation2 [shape = 'f32[8,128]{1,0:T(8,128)}', space=vmem, size = 0x1000, scoped, tag = 'scratch operand']
  %s0 = inlined_call_operand.hbm [shape: f32[16,128], index: 0, kind: input, shape index: {}]
  %s1 = inlined_call_operand.hbm [shape: f32[128,128], index: 1, kind: input, shape index: {}]
  %s2 = inlined_call_operand.vmem [shape: f32[1,128], index: 2, kind: input, shape index: {}]
  %s3 = inlined_call_operand.hbm [shape: f32[128,128], index: 3, kind: input, shape index: {}]
  %s4 = inlined_call_operand.vmem [shape: f32[1,128], index: 4, kind: input, shape index: {}]
  %s5 = inlined_call_operand.hbm [shape: f32[16,128], index: 5, kind: output, shape index: {}]
  %s6 = sld [smem:[#allocation0]]
  $region73: #{tpu_custom_call.1} parent=0
    _
  %s8 = ssub.s32 1, %s6
  %s9 = scalar_select 0, %s8, %s6
  $region1: #{tpu_custom_call.1} parent=0
    #allocation3 [shape = 'u8[8192]{0}', space=vmem, size = 0x2000, scoped, tag = 'input window, operand 0']
    #allocation4 [shape = 's32[2]{0}', space=sflag, size = 0x8, scoped, tag = 'scoped memory for tpu_custom_call.1']
    #allocation5 [shape = 's32[2]{0}', space=sflag, size = 0x8, scoped, tag = 'scoped memory for tpu_custom_call.1']
    #allocation6 [shape = 'u8[65536]{0}', space=vmem, size = 0x10000, scoped, tag = 'input window, operand 1, single buffered']
    #allocation7 [shape = 's32[1]{0}', space=sflag, size = 0x4, scoped, tag = 'scoped memory for tpu_custom_call.1']
    #allocation8 [shape = 'u8[65536]{0}', space=vmem, size = 0x10000, scoped, tag = 'input window, operand 3, single buffered']
    #allocation9 [shape = 'u8[8192]{0}', space=vmem, size = 0x2000, scoped, tag = 'output window, operand 0']
    %10 = vsyncpa [#allocation4], 0
    %s11 = scalar_lea.sflag [#allocation4], 1
    %12 = vsyncpa %s11, 0
    %13 = vsyncpa [#allocation7], 0
    %14 = vsyncpa [#allocation5], 0
    %s15 = scalar_lea.sflag [#allocation5], 1
    %16 = vsyncpa %s15, 0
    loop: start=0, step=1, limit=4
    $region2: #{tpu_custom_call.1} parent=1 // loop_pre_header
      _
    $region3: #{tpu_custom_call.1} parent=1 // loop_header
      %s18 = sphi 0, %s22
      %p19 = scmp.ge.s32.totalorder %s18, 4
      %s25 = sphi 0, %s44
      %s26 = sphi 0, %s40
      %s27 = sphi 0, %s36
      %s28 = sphi 0, %s25
      %s29 = sphi 0, %s26
      %s30 = sphi 0, %s27
      %s31 = sphi 0, %s28
      %s32 = sphi 0, %s29
      %s33 = sphi 0, %s30
      %s47 = sphi 0, %s49
      %s50 = sphi 0, %s47
      %s51 = sphi 0, %s50
      %s67 = sphi 0, %s51
      %s73 = sphi 0, %s75
      %s76 = sphi 0, %s73
      %s77 = sphi 0, %s76
      %s93 = sphi 0, %s77
      %s99 = sphi 0, %s101
      %s102 = sphi 0, %s99
      %s103 = sphi 0, %s102
      %s119 = sphi 0, %s103
      %s127 = sphi 0, %s129
      %s130 = sphi 0, %s127
      %s131 = sphi 0, %s130
      %s147 = sphi 0, %s131
      %s153 = sphi 0, %s155
      %s156 = sphi 0, %s153
      %s157 = sphi 0, %s156
      %s173 = sphi 0, %s157
      %s181 = sphi 0, %s183
      %s184 = sphi 0, %s181
      %s185 = sphi 0, %s184
      %s201 = sphi 0, %s185
    $region4: #{tpu_custom_call.1} parent=1 // loop_header_branch
      %21 = sbr.rel (%p19) target = $region8
    $region5: #{tpu_custom_call.1} parent=1 // loop_body
      %s23 = ssub.s32 %s18, 1
      %s24 = ssub.s32 %s18, 2
      %s34 = sadd.s32 1, %s27
      %p35 = scmp.ge.s32.totalorder %s34, 1
      %s36 = scalar_select %p35, 0, %s34
      %s37 = sadd.s32 1, %s26
      %s38 = scalar_select %p35, %s37, %s26
      %p39 = scmp.ge.s32.totalorder %s38, 1
      %s40 = scalar_select %p39, 0, %s38
      %s41 = sadd.s32 1, %s25
      %s42 = scalar_select %p39, %s41, %s25
      %p43 = scmp.ge.s32.totalorder %s42, 2
      %s44 = scalar_select %p43, 0, %s42
      %s45 = ssub.s32 %s25, %s44
      %p46 = scmp.eq.s32.totalorder %s45, 0
      %s48 = sadd.s32 %s47, 1
      %s49 = scalar_select %p46, %s47, %s48
      %p52 = pneg %p46
      %p53 = scmp.eq.s32.totalorder %s18, 1
      %p54 = por %p52, %p53
      %p55 = scmp.ne.s32.totalorder %s47, %s50
      %p56 = scmp.eq.s32.totalorder %s18, 0
      %p57 = por %p55, %p56
      %p58 = scmp.ne.s32.totalorder %s47, %s50
      %p59 = scmp.eq.s32.totalorder %s23, 1
      %p60 = por %p58, %p59
      %p61 = scmp.ne.s32.totalorder %s50, %s51
      %p62 = scmp.eq.s32.totalorder %s23, 0
      %p63 = por %p61, %p62
      %p64 = scmp.ne.s32.totalorder %s50, %s51
      %p65 = scmp.eq.s32.totalorder %s24, 1
      %p66 = por %p64, %p65
      %p68 = scmp.ne.s32.totalorder %s51, %s67
      %p69 = scmp.eq.s32.totalorder %s24, 0
      %p70 = por %p68, %p69
      %s71 = ssub.s32 %s27, %s36
      %p72 = scmp.eq.s32.totalorder %s71, 0
      %s74 = sadd.s32 %s73, 1
      %s75 = scalar_select %p72, %s73, %s74
      %p78 = pneg %p72
      %p79 = scmp.eq.s32.totalorder %s18, 1
      %p80 = por %p78, %p79
      %p81 = scmp.ne.s32.totalorder %s73, %s76
      %p82 = scmp.eq.s32.totalorder %s18, 0
      %p83 = por %p81, %p82
      %p84 = scmp.ne.s32.totalorder %s73, %s76
      %p85 = scmp.eq.s32.totalorder %s23, 1
      %p86 = por %p84, %p85
      %p87 = scmp.ne.s32.totalorder %s76, %s77
      %p88 = scmp.eq.s32.totalorder %s23, 0
      %p89 = por %p87, %p88
      %p90 = scmp.ne.s32.totalorder %s76, %s77
      %p91 = scmp.eq.s32.totalorder %s24, 1
      %p92 = por %p90, %p91
      %p94 = scmp.ne.s32.totalorder %s77, %s93
      %p95 = scmp.eq.s32.totalorder %s24, 0
      %p96 = por %p94, %p95
      %s97 = ssub.s32 %s27, %s36
      %p98 = scmp.eq.s32.totalorder %s97, 0
      %s100 = sadd.s32 %s99, 1
      %s101 = scalar_select %p98, %s99, %s100
      %p104 = pneg %p98
      %p105 = scmp.eq.s32.totalorder %s18, 1
      %p106 = por %p104, %p105
      %p107 = scmp.ne.s32.totalorder %s99, %s102
      %p108 = scmp.eq.s32.totalorder %s18, 0
      %p109 = por %p107, %p108
      %p110 = scmp.ne.s32.totalorder %s99, %s102
      %p111 = scmp.eq.s32.totalorder %s23, 1
      %p112 = por %p110, %p111
      %p113 = scmp.ne.s32.totalorder %s102, %s103
      %p114 = scmp.eq.s32.totalorder %s23, 0
      %p115 = por %p113, %p114
      %p116 = scmp.ne.s32.totalorder %s102, %s103
      %p117 = scmp.eq.s32.totalorder %s24, 1
      %p118 = por %p116, %p117
      %p120 = scmp.ne.s32.totalorder %s103, %s119
      %p121 = scmp.eq.s32.totalorder %s24, 0
      %p122 = por %p120, %p121
      %s123 = ssub.s32 %s27, %s36
      %s124 = ssub.s32 %s26, %s40
      %s125 = sor.u32 %s123, %s124
      %p126 = scmp.eq.s32.totalorder %s125, 0
      %s128 = sadd.s32 %s127, 1
      %s129 = scalar_select %p126, %s127, %s128
      %p132 = pneg %p126
      %p133 = scmp.eq.s32.totalorder %s18, 1
      %p134 = por %p132, %p133
      %p135 = scmp.ne.s32.totalorder %s127, %s130
      %p136 = scmp.eq.s32.totalorder %s18, 0
      %p137 = por %p135, %p136
      %p138 = scmp.ne.s32.totalorder %s127, %s130
      %p139 = scmp.eq.s32.totalorder %s23, 1
      %p140 = por %p138, %p139
      %p141 = scmp.ne.s32.totalorder %s130, %s131
      %p142 = scmp.eq.s32.totalorder %s23, 0
      %p143 = por %p141, %p142
      %p144 = scmp.ne.s32.totalorder %s130, %s131
      %p145 = scmp.eq.s32.totalorder %s24, 1
      %p146 = por %p144, %p145
      %p148 = scmp.ne.s32.totalorder %s131, %s147
      %p149 = scmp.eq.s32.totalorder %s24, 0
      %p150 = por %p148, %p149
      %s151 = ssub.s32 %s26, %s40
      %p152 = scmp.eq.s32.totalorder %s151, 0
      %s154 = sadd.s32 %s153, 1
      %s155 = scalar_select %p152, %s153, %s154
      %p158 = pneg %p152
      %p159 = scmp.eq.s32.totalorder %s18, 1
      %p160 = por %p158, %p159
      %p161 = scmp.ne.s32.totalorder %s153, %s156
      %p162 = scmp.eq.s32.totalorder %s18, 0
      %p163 = por %p161, %p162
      %p164 = scmp.ne.s32.totalorder %s153, %s156
      %p165 = scmp.eq.s32.totalorder %s23, 1
      %p166 = por %p164, %p165
      %p167 = scmp.ne.s32.totalorder %s156, %s157
      %p168 = scmp.eq.s32.totalorder %s23, 0
      %p169 = por %p167, %p168
      %p170 = scmp.ne.s32.totalorder %s156, %s157
      %p171 = scmp.eq.s32.totalorder %s24, 1
      %p172 = por %p170, %p171
      %p174 = scmp.ne.s32.totalorder %s157, %s173
      %p175 = scmp.eq.s32.totalorder %s24, 0
      %p176 = por %p174, %p175
      %s177 = ssub.s32 %s25, %s44
      %s178 = ssub.s32 %s26, %s40
      %s179 = sor.u32 %s177, %s178
      %p180 = scmp.eq.s32.totalorder %s179, 0
      %s182 = sadd.s32 %s181, 1
      %s183 = scalar_select %p180, %s181, %s182
      %p186 = pneg %p180
      %p187 = scmp.eq.s32.totalorder %s18, 1
      %p188 = por %p186, %p187
      %p189 = scmp.ne.s32.totalorder %s181, %s184
      %p190 = scmp.eq.s32.totalorder %s18, 0
      %p191 = por %p189, %p190
      %p192 = scmp.ne.s32.totalorder %s181, %s184
      %p193 = scmp.eq.s32.totalorder %s23, 1
      %p194 = por %p192, %p193
      %p195 = scmp.ne.s32.totalorder %s184, %s185
      %p196 = scmp.eq.s32.totalorder %s23, 0
      %p197 = por %p195, %p196
      %p198 = scmp.ne.s32.totalorder %s184, %s185
      %p199 = scmp.eq.s32.totalorder %s24, 1
      %p200 = por %p198, %p199
      %p202 = scmp.ne.s32.totalorder %s185, %s201
      %p203 = scmp.eq.s32.totalorder %s24, 0
      %p204 = por %p202, %p203
      %p205 = scmp.le.s32.totalorder 1, %s18
      %p206 = scmp.lt.s32.totalorder %s18, 3
      %p207 = pnand %p205, %p206
      %p208 = pneg %p207
      // Predicated region
      $region9: #{tpu_custom_call.1} parent=5 // pred_check
        _
      $region10: #{tpu_custom_call.1} parent=5 // pred_check_branch
        %210 = sbr.rel (%p207) target = $region12
      $region11: #{tpu_custom_call.1} parent=5 // pred_region
        %s211 = ssub.s32 %s18, 1
        // Predicated region
        $region13: #{tpu_custom_call.1} parent=11 // pred_check
          %p212 = pneg %p89
        $region14: #{tpu_custom_call.1} parent=11 // pred_check_branch
          %214 = sbr.rel (%p212) target = $region16
        $region15: #{tpu_custom_call.1} parent=11 // pred_region
          %s216 = ssub.s32 2048, 2048
          %217 = vsyncadd [#allocation7], %s216
          %s218 = smul.addr %s30, 128
          %s219 = scalar_lea.hbm %s1, %s218
          %s220 = sshll.u32 [#allocation6], 4
          %s221 = int_to_ptr.vmem [resolvable:$true] %s220
          %226 = dma.hbm_to_vmem [thread:$0]  %s219, 2048, %s221, [#allocation7], 128, 128, 8
        $region16: #{tpu_custom_call.1} parent=11 // pred_fallthru
          _
        // Predicated region
        $region17: #{tpu_custom_call.1} parent=11 // pred_check
          %p227 = pneg %p115
        $region18: #{tpu_custom_call.1} parent=11 // pred_check_branch
          %229 = sbr.rel (%p227) target = $region20
        $region19: #{tpu_custom_call.1} parent=11 // pred_region
          %p230 = scmp.lt.s32.totalorder %s30, 0
          %s231 = scalar_select %p230, %s30, 0
          %s232 = scalar_lea.vmem %s2, %s231
        $region20: #{tpu_custom_call.1} parent=11 // pred_fallthru
          _
        // Predicated region
        $region21: #{tpu_custom_call.1} parent=11 // pred_check
          %p233 = pneg %p143
        $region22: #{tpu_custom_call.1} parent=11 // pred_check_branch
          %235 = sbr.rel (%p233) target = $region24
        $region23: #{tpu_custom_call.1} parent=11 // pred_region
          %s236 = smul.u32 16, %s30
          %s238 = ssub.s32 2048, 2048
          %239 = vsyncadd [#allocation7], %s238
          %s240 = sadd.s32 %s29, %s236
          %s241 = smul.addr %s240, 128
          %s242 = scalar_lea.hbm %s3, %s241
          %s243 = sshll.u32 [#allocation8], 4
          %s244 = int_to_ptr.vmem [resolvable:$true] %s243
          %249 = dma.hbm_to_vmem [thread:$0]  %s242, 2048, %s244, [#allocation7], 128, 128, 8
        $region24: #{tpu_custom_call.1} parent=11 // pred_fallthru
          _
        // Predicated region
        $region25: #{tpu_custom_call.1} parent=11 // pred_check
          %p250 = pneg %p169
        $region26: #{tpu_custom_call.1} parent=11 // pred_check_branch
          %252 = sbr.rel (%p250) target = $region28
        $region27: #{tpu_custom_call.1} parent=11 // pred_region
          %p253 = scmp.lt.s32.totalorder %s29, 0
          %s254 = scalar_select %p253, %s29, 0
          %s255 = scalar_lea.vmem %s4, %s254
        $region28: #{tpu_custom_call.1} parent=11 // pred_fallthru
          _
      $region12: #{tpu_custom_call.1} parent=5 // pred_fallthru
        _
      %p256 = scmp.lt.s32.totalorder %s18, 2
      // Predicated region
      $region29: #{tpu_custom_call.1} parent=5 // pred_check
        %p257 = pneg %p256
      $region30: #{tpu_custom_call.1} parent=5 // pred_check_branch
        %259 = sbr.rel (%p257) target = $region32
      $region31: #{tpu_custom_call.1} parent=5 // pred_region
        // Predicated region
        $region33: #{tpu_custom_call.1} parent=31 // pred_check
          %p260 = pneg %p57
        $region34: #{tpu_custom_call.1} parent=31 // pred_check_branch
          %262 = sbr.rel (%p260) target = $region36
        $region35: #{tpu_custom_call.1} parent=31 // pred_region
          %s263 = sand.u32 %s47, 1
          %s264 = scalar_lea.sflag [#allocation4], %s263
          %s265 = sand.u32 %s47, 1
          %s266 = smul.addr %s265, 8
          %s267 = scalar_lea.vmem [#allocation3], %s266
          %s269 = ssub.s32 128, 128
          %270 = vsyncadd %s264, %s269
          %s271 = smul.addr %s25, 128
          %s272 = scalar_lea.hbm %s0, %s271
          %s274 = sshll.u32 %s267, 4
          %s275 = int_to_ptr.vmem [resolvable:$true] %s274
          %277 = dma.hbm_to_vmem [thread:$0]  %s272, 128, %s275, %s264
        $region36: #{tpu_custom_call.1} parent=31 // pred_fallthru
          _
      $region32: #{tpu_custom_call.1} parent=5 // pred_fallthru
        _
      %p278 = scmp.le.s32.totalorder 1, %s18
      %p279 = scmp.lt.s32.totalorder %s18, 3
      %p280 = pnand %p278, %p279
      %p281 = pneg %p280
      // Predicated region
      $region37: #{tpu_custom_call.1} parent=5 // pred_check
        _
      $region38: #{tpu_custom_call.1} parent=5 // pred_check_branch
        %283 = sbr.rel (%p280) target = $region40
      $region39: #{tpu_custom_call.1} parent=5 // pred_region
        %s284 = ssub.s32 %s18, 1
        %s285 = sand.u32 %s50, 1
        %s286 = scalar_lea.sflag [#allocation4], %s285
        %s287 = sand.u32 %s50, 1
        %s288 = smul.addr %s287, 8
        %s289 = scalar_lea.vmem [#allocation3], %s288
        // Predicated region
        $region41: #{tpu_custom_call.1} parent=39 // pred_check
          %p290 = pneg %p63
        $region42: #{tpu_custom_call.1} parent=39 // pred_check_branch
          %292 = sbr.rel (%p290) target = $region44
        $region43: #{tpu_custom_call.1} parent=39 // pred_region
          %293 = dma.done %s286, 128
        $region44: #{tpu_custom_call.1} parent=39 // pred_fallthru
          _
        // Predicated region
        $region45: #{tpu_custom_call.1} parent=39 // pred_check
          %p294 = pneg %p89
        $region46: #{tpu_custom_call.1} parent=39 // pred_check_branch
          %296 = sbr.rel (%p294) target = $region48
        $region47: #{tpu_custom_call.1} parent=39 // pred_region
          %297 = dma.done [#allocation7], 2048
        $region48: #{tpu_custom_call.1} parent=39 // pred_fallthru
          _
        // Predicated region
        $region49: #{tpu_custom_call.1} parent=39 // pred_check
          %p298 = pneg %p143
        $region50: #{tpu_custom_call.1} parent=39 // pred_check_branch
          %300 = sbr.rel (%p298) target = $region52
        $region51: #{tpu_custom_call.1} parent=39 // pred_region
          %301 = dma.done [#allocation7], 2048
        $region52: #{tpu_custom_call.1} parent=39 // pred_fallthru
          _
        %s302 = sand.u32 %s50, 1
        %s303 = scalar_lea.sflag [#allocation4], %s302
        %s304 = sand.u32 %s50, 1
        %s305 = smul.addr %s304, 8
        %s306 = scalar_lea.vmem [#allocation3], %s305
        %p307 = pneg %p63
        %p308 = pneg %p60
        %p309 = pneg %p89
        %p310 = pneg %p86
        %p311 = scmp.lt.s32.totalorder %s30, 0
        %s312 = scalar_select %p311, %s30, 0
        %s313 = scalar_lea.vmem %s2, %s312
        %p314 = pneg %p115
        %p315 = pneg %p112
        %p316 = pneg %p143
        %p317 = pneg %p140
        %p318 = scmp.lt.s32.totalorder %s29, 0
        %s319 = scalar_select %p318, %s29, 0
        %s320 = scalar_lea.vmem %s4, %s319
        %p321 = pneg %p169
        %p322 = pneg %p166
        %p323 = pneg %p197
        %p324 = pneg %p194
        %s325 = sand.u32 %s184, 1
        %s326 = scalar_lea.sflag [#allocation5], %s325
        %s327 = sand.u32 %s184, 1
        %s328 = smul.addr %s327, 8
        %s329 = scalar_lea.vmem [#allocation9], %s328
        %p330 = scmp.lt.s32.totalorder %s30, 0
        %s331 = scalar_select %p330, %s30, 0
        %s332 = scalar_lea.vmem %s2, %s331
        %s333 = smul.u32 16, %s30
        %p334 = scmp.lt.s32.totalorder %s29, 0
        %s335 = scalar_select %p334, %s29, 0
        %s336 = scalar_lea.vmem %s4, %s335
        %p337 = scmp.eq.s32.totalorder %s30, 0
        // Predicated region
        $region53: #{tpu_custom_call.1} parent=39 // pred_check
          %p338 = pneg %p337
        $region54: #{tpu_custom_call.1} parent=39 // pred_check_branch
          %340 = sbr.rel (%p338) target = $region56
        $region55: #{tpu_custom_call.1} parent=39 // pred_region
          %341 = vst [vmem:[#allocation2] sm:$0xff] 0.0
        $region56: #{tpu_custom_call.1} parent=39 // pred_fallthru
          _
        %v342 = vld [vmem:[%s289] sm:$0xff]
        %v343 = vld [vmem:[#allocation6] sm:$0xff]
        %v344 = vld [vmem:[#allocation6 + $0x8] sm:$0xff]
        %v345 = vld [vmem:[#allocation6 + $0x10] sm:$0xff]
        %v346 = vld [vmem:[#allocation6 + $0x18] sm:$0xff]
        %v347 = vld [vmem:[#allocation6 + $0x20] sm:$0xff]
        %v348 = vld [vmem:[#allocation6 + $0x28] sm:$0xff]
        %v349 = vld [vmem:[#allocation6 + $0x30] sm:$0xff]
        %v350 = vld [vmem:[#allocation6 + $0x38] sm:$0xff]
        %v351 = vld [vmem:[#allocation6 + $0x40] sm:$0xff]
        %v352 = vld [vmem:[#allocation6 + $0x48] sm:$0xff]
        %v353 = vld [vmem:[#allocation6 + $0x50] sm:$0xff]
        %v354 = vld [vmem:[#allocation6 + $0x58] sm:$0xff]
        %v355 = vld [vmem:[#allocation6 + $0x60] sm:$0xff]
        %v356 = vld [vmem:[#allocation6 + $0x68] sm:$0xff]
        %v357 = vld [vmem:[#allocation6 + $0x70] sm:$0xff]
        %v358 = vld [vmem:[#allocation6 + $0x78] sm:$0xff]
        %v359 = vld [vmem:[%s332] sm:$0x1]
        %v361 = vlaneseq
        %v362 = vshrl.u32 %v361, 7
        %v363 = vsub.s32 0, %v362
        %v364 = vrot.slane %v359, %v363
        %366 = vmatprep.subr.mxu0 0.0
        %367 = vmatpush1.msra.mxu0 %v343
        %368 = vmatprep.subr.mxu0 0.0
        %369 = vmatpush1.msra.mxu0 %v344
        %370 = vmatprep.subr.mxu0 0.0
        %371 = vmatpush1.msra.mxu0 %v345
        %372 = vmatprep.subr.mxu0 0.0
        %373 = vmatpush1.msra.mxu0 %v346
        %374 = vmatprep.subr.mxu0 0.0
        %375 = vmatpush1.msra.mxu0 %v347
        %376 = vmatprep.subr.mxu0 0.0
        %377 = vmatpush1.msra.mxu0 %v348
        %378 = vmatprep.subr.mxu0 0.0
        %379 = vmatpush1.msra.mxu0 %v349
        %380 = vmatprep.subr.mxu0 0.0
        %381 = vmatpush1.msra.mxu0 %v350
        %382 = vmatprep.subr.mxu0 0.0
        %383 = vmatpush1.msra.mxu0 %v351
        %384 = vmatprep.subr.mxu0 0.0
        %385 = vmatpush1.msra.mxu0 %v352
        %386 = vmatprep.subr.mxu0 0.0
        %387 = vmatpush1.msra.mxu0 %v353
        %388 = vmatprep.subr.mxu0 0.0
        %389 = vmatpush1.msra.mxu0 %v354
        %390 = vmatprep.subr.mxu0 0.0
        %391 = vmatpush1.msra.mxu0 %v355
        %392 = vmatprep.subr.mxu0 0.0
        %393 = vmatpush1.msra.mxu0 %v356
        %394 = vmatprep.subr.mxu0 0.0
        %395 = vmatpush1.msra.mxu0 %v357
        %396 = vmatprep.subr.mxu0 0.0
        %397 = vmatpush1.msra.mxu0 %v358
        %398 = vmatprep.subr.mxu0 0.0
        %399 = vmatpush1.msra.mxu0 0.0
        %400 = vmatprep.subr.mxu0 0.0
        %401 = vmatpush1.msra.mxu0 0.0
        %402 = vmatprep.subr.mxu0 0.0
        %403 = vmatpush1.msra.mxu0 0.0
        %404 = vmatprep.subr.mxu0 0.0
        %405 = vmatpush1.msra.mxu0 0.0
        %406 = vmatprep.subr.mxu0 0.0
        %407 = vmatpush1.msra.mxu0 0.0
        %408 = vmatprep.subr.mxu0 0.0
        %409 = vmatpush1.msra.mxu0 0.0
        %410 = vmatprep.subr.mxu0 0.0
        %411 = vmatpush1.msra.mxu0 0.0
        %412 = vmatprep.subr.mxu0 0.0
        %413 = vmatpush1.msra.mxu0 0.0
        %414 = vmatprep.subr.mxu0 0.0
        %415 = vmatpush1.msra.mxu0 0.0
        %416 = vmatprep.subr.mxu0 0.0
        %417 = vmatpush1.msra.mxu0 0.0
        %418 = vmatprep.subr.mxu0 0.0
        %419 = vmatpush1.msra.mxu0 0.0
        %420 = vmatprep.subr.mxu0 0.0
        %421 = vmatpush1.msra.mxu0 0.0
        %422 = vmatprep.subr.mxu0 0.0
        %423 = vmatpush1.msra.mxu0 0.0
        %424 = vmatprep.subr.mxu0 0.0
        %425 = vmatpush1.msra.mxu0 0.0
        %426 = vmatprep.subr.mxu0 0.0
        %427 = vmatpush1.msra.mxu0 0.0
        %428 = vmatprep.subr.mxu0 0.0
        %429 = vmatpush1.msra.mxu0 0.0
        %430 = vmatprep.mubr.f32.mxu0 0.0
        %431 = vmatmul.mubr.f32.gmra.mrb[0].mxu0 %v342
        %v432 = vpop.f32.mrb[0].mxu0
        %v433 = vadd.f32 %v364, %v432
        %v434 = vpop.f32.mrb[0].mxu0
        %435 = vdwg.mxu0
        %v436 = vmul.f32 %v433, 0.5
        %v437 = vmul.f32 %v433, 0.70710677
        %v438 = verf.f32.pop %v437
        %v439 = vadd.f32 %v438, 1.0
        %v440 = vmul.f32 %v436, %v439
        %v441 = vld [vmem:[#allocation2] sm:$0xff]
        %v442 = vld [vmem:[#allocation8] sm:$0xff]
        %v443 = vld [vmem:[#allocation8 + $0x8] sm:$0xff]
        %v444 = vld [vmem:[#allocation8 + $0x10] sm:$0xff]
        %v445 = vld [vmem:[#allocation8 + $0x18] sm:$0xff]
        %v446 = vld [vmem:[#allocation8 + $0x20] sm:$0xff]
        %v447 = vld [vmem:[#allocation8 + $0x28] sm:$0xff]
        %v448 = vld [vmem:[#allocation8 + $0x30] sm:$0xff]
        %v449 = vld [vmem:[#allocation8 + $0x38] sm:$0xff]
        %v450 = vld [vmem:[#allocation8 + $0x40] sm:$0xff]
        %v451 = vld [vmem:[#allocation8 + $0x48] sm:$0xff]
        %v452 = vld [vmem:[#allocation8 + $0x50] sm:$0xff]
        %v453 = vld [vmem:[#allocation8 + $0x58] sm:$0xff]
        %v454 = vld [vmem:[#allocation8 + $0x60] sm:$0xff]
        %v455 = vld [vmem:[#allocation8 + $0x68] sm:$0xff]
        %v456 = vld [vmem:[#allocation8 + $0x70] sm:$0xff]
        %v457 = vld [vmem:[#allocation8 + $0x78] sm:$0xff]
        %458 = vmatprep.subr.mxu0 0.0
        %459 = vmatpush1.msra.mxu0 %v442
        %460 = vmatprep.subr.mxu0 0.0
        %461 = vmatpush1.msra.mxu0 %v443
        %462 = vmatprep.subr.mxu0 0.0
        %463 = vmatpush1.msra.mxu0 %v444
        %464 = vmatprep.subr.mxu0 0.0
        %465 = vmatpush1.msra.mxu0 %v445
        %466 = vmatprep.subr.mxu0 0.0
        %467 = vmatpush1.msra.mxu0 %v446
        %468 = vmatprep.subr.mxu0 0.0
        %469 = vmatpush1.msra.mxu0 %v447
        %470 = vmatprep.subr.mxu0 0.0
        %471 = vmatpush1.msra.mxu0 %v448
        %472 = vmatprep.subr.mxu0 0.0
        %473 = vmatpush1.msra.mxu0 %v449
        %474 = vmatprep.subr.mxu0 0.0
        %475 = vmatpush1.msra.mxu0 %v450
        %476 = vmatprep.subr.mxu0 0.0
        %477 = vmatpush1.msra.mxu0 %v451
        %478 = vmatprep.subr.mxu0 0.0
        %479 = vmatpush1.msra.mxu0 %v452
        %480 = vmatprep.subr.mxu0 0.0
        %481 = vmatpush1.msra.mxu0 %v453
        %482 = vmatprep.subr.mxu0 0.0
        %483 = vmatpush1.msra.mxu0 %v454
        %484 = vmatprep.subr.mxu0 0.0
        %485 = vmatpush1.msra.mxu0 %v455
        %486 = vmatprep.subr.mxu0 0.0
        %487 = vmatpush1.msra.mxu0 %v456
        %488 = vmatprep.subr.mxu0 0.0
        %489 = vmatpush1.msra.mxu0 %v457
        %490 = vmatprep.subr.mxu0 0.0
        %491 = vmatpush1.msra.mxu0 0.0
        %492 = vmatprep.subr.mxu0 0.0
        %493 = vmatpush1.msra.mxu0 0.0
        %494 = vmatprep.subr.mxu0 0.0
        %495 = vmatpush1.msra.mxu0 0.0
        %496 = vmatprep.subr.mxu0 0.0
        %497 = vmatpush1.msra.mxu0 0.0
        %498 = vmatprep.subr.mxu0 0.0
        %499 = vmatpush1.msra.mxu0 0.0
        %500 = vmatprep.subr.mxu0 0.0
        %501 = vmatpush1.msra.mxu0 0.0
        %502 = vmatprep.subr.mxu0 0.0
        %503 = vmatpush1.msra.mxu0 0.0
        %504 = vmatprep.subr.mxu0 0.0
        %505 = vmatpush1.msra.mxu0 0.0
        %506 = vmatprep.subr.mxu0 0.0
        %507 = vmatpush1.msra.mxu0 0.0
        %508 = vmatprep.subr.mxu0 0.0
        %509 = vmatpush1.msra.mxu0 0.0
        %510 = vmatprep.subr.mxu0 0.0
        %511 = vmatpush1.msra.mxu0 0.0
        %512 = vmatprep.subr.mxu0 0.0
        %513 = vmatpush1.msra.mxu0 0.0
        %514 = vmatprep.subr.mxu0 0.0
        %515 = vmatpush1.msra.mxu0 0.0
        %516 = vmatprep.subr.mxu0 0.0
        %517 = vmatpush1.msra.mxu0 0.0
        %518 = vmatprep.subr.mxu0 0.0
        %519 = vmatpush1.msra.mxu0 0.0
        %520 = vmatprep.subr.mxu0 0.0
        %521 = vmatpush1.msra.mxu0 0.0
        %522 = vmatprep.mubr.f32.mxu0 0.0
        %523 = vmatmul.mubr.f32.gmra.mrb[0].mxu0 %v440
        %v524 = vpop.f32.mrb[0].mxu0
        %v525 = vadd.f32 0.0, %v524
        %v526 = vpop.f32.mrb[0].mxu0
        %527 = vdwg.mxu0
        %v528 = vadd.f32 %v441, %v525
        %529 = vst [vmem:[#allocation2] sm:$0xff] %v528
        // Predicated region
        $region57: #{tpu_custom_call.1} parent=39 // pred_check
          %p530 = pneg %p337
        $region58: #{tpu_custom_call.1} parent=39 // pred_check_branch
          %532 = sbr.rel (%p530) target = $region60
        $region59: #{tpu_custom_call.1} parent=39 // pred_region
          %v533 = vld [vmem:[#allocation2] sm:$0xff]
          %v534 = vld [vmem:[%s336] sm:$0x1]
          %v536 = vlaneseq
          %v537 = vshrl.u32 %v536, 7
          %v538 = vsub.s32 0, %v537
          %v539 = vrot.slane %v534, %v538
          %v541 = vadd.f32 %v533, %v539
          %542 = vst [vmem:[%s329] sm:$0xff] %v541
        $region60: #{tpu_custom_call.1} parent=39 // pred_fallthru
          _
        %s543 = sand.u32 %s184, 1
        %s544 = scalar_lea.sflag [#allocation5], %s543
        %s545 = sand.u32 %s184, 1
        %s546 = smul.addr %s545, 8
        %s547 = scalar_lea.vmem [#allocation9], %s546
        // Predicated region
        $region61: #{tpu_custom_call.1} parent=39 // pred_check
          %p548 = pneg %p194
        $region62: #{tpu_custom_call.1} parent=39 // pred_check_branch
          %550 = sbr.rel (%p548) target = $region64
        $region63: #{tpu_custom_call.1} parent=39 // pred_region
          %s552 = ssub.s32 128, 128
          %553 = vsyncadd %s544, %s552
          %s554 = sadd.s32 %s29, %s28
          %s555 = smul.addr %s554, 128
          %s556 = scalar_lea.hbm %s5, %s555
          %s558 = sshll.u32 %s547, 4
          %s559 = int_to_ptr.vmem [resolvable:$true] %s558
          %561 = dma.vmem_to_hbm [thread:$0]  %s559, 128, %s556, %s544
        $region64: #{tpu_custom_call.1} parent=39 // pred_fallthru
          _
      $region40: #{tpu_custom_call.1} parent=5 // pred_fallthru
        _
      %p562 = scmp.le.s32.totalorder 2, %s18
      // Predicated region
      $region65: #{tpu_custom_call.1} parent=5 // pred_check
        %p563 = pneg %p562
      $region66: #{tpu_custom_call.1} parent=5 // pred_check_branch
        %565 = sbr.rel (%p563) target = $region68
      $region67: #{tpu_custom_call.1} parent=5 // pred_region
        %s566 = ssub.s32 %s18, 2
        // Predicated region
        $region69: #{tpu_custom_call.1} parent=67 // pred_check
          %p567 = pneg %p200
        $region70: #{tpu_custom_call.1} parent=67 // pred_check_branch
          %569 = sbr.rel (%p567) target = $region72
        $region71: #{tpu_custom_call.1} parent=67 // pred_region
          %s570 = sand.u32 %s185, 1
          %s571 = scalar_lea.sflag [#allocation5], %s570
          %s572 = sand.u32 %s185, 1
          %s573 = smul.addr %s572, 8
          %s574 = scalar_lea.vmem [#allocation9], %s573
          %575 = dma.done %s571, 128
        $region72: #{tpu_custom_call.1} parent=67 // pred_fallthru
          _
      $region68: #{tpu_custom_call.1} parent=5 // pred_fallthru
        _
    $region6: #{tpu_custom_call.1} parent=1 // loop_footer
      %s22 = sadd.s32 1, %s18
    $region7: #{tpu_custom_call.1} parent=1 // loop_footer_branch
      %17 = sbr.rel target = $region3
    $region8: #{tpu_custom_call.1} parent=1 // loop_exit
      _
    %576 = vsyncpa [#allocation4], 1
    %s577 = scalar_lea.sflag [#allocation4], 1
    %578 = vsyncpa %s577, 1
    %579 = vsyncpa [#allocation7], 1
    %580 = vsyncpa [#allocation5], 1
    %s581 = scalar_lea.sflag [#allocation5], 1
    %582 = vsyncpa %s581, 1

</llo_original>
